<compile_context>
chip_gen: v7x
topology: tpu7x:2x2x1
jax: 0.10.0
libtpu: 0.0.40
codegen_flags: <defaults>
</compile_context>

<pallas_src>
import jax
import jax.numpy as jnp
from jax import lax
from jax.experimental import pallas as pl
from jax.experimental.pallas import tpu as pltpu


def _linear_kernel(x_ref, w_ref, b_ref, o_ref):
    # x: (tile_m, K), w: (N, K) in native PyTorch layout, b: (1, N).
    x = x_ref[...]
    w = w_ref[...]
    acc = lax.dot_general(
        x, w,
        dimension_numbers=(((1,), (1,)), ((), ())),   # contract K with K -> (tile_m, N)
        preferred_element_type=jnp.float32,
    )
    acc = acc + b_ref[...].astype(jnp.float32)
    o_ref[...] = acc.astype(o_ref.dtype)


def time2vec_placeholder_forward(x, weight, bias, *, max_tile_m=512):
    """y = x @ weight.T + bias, matching nn.Linear(input_dim, embed_dim).

    x:      [..., input_dim]
    weight: [embed_dim, input_dim]   (PyTorch convention, passed as-is)
    bias:   [embed_dim]
    """
    *lead, input_dim = x.shape
    embed_dim = weight.shape[0]
    m = 1
    for d in lead:
        m *= d

    x2d = x.reshape(m, input_dim)
    b2d = bias.reshape(1, embed_dim)

    # Sublane-align rows; cap the tile so large M is pipelined over a grid.
    m_aligned = max(8, ((m + 7) // 8) * 8)
    tile_m = min(max_tile_m, m_aligned)
    m_pad = ((m_aligned + tile_m - 1) // tile_m) * tile_m
    if m_pad != m:
        x2d = jnp.pad(x2d, ((0, m_pad - m), (0, 0)))

    grid_m = m_pad // tile_m

    out = pl.pallas_call(
        _linear_kernel,
        out_shape=jax.ShapeDtypeStruct((m_pad, embed_dim), x.dtype),
        grid=(grid_m,),
        in_specs=[
            pl.BlockSpec((tile_m, input_dim), lambda i: (i, 0)),
            pl.BlockSpec((embed_dim, input_dim), lambda i: (0, 0)),
            pl.BlockSpec((1, embed_dim), lambda i: (0, 0)),
        ],
        out_specs=pl.BlockSpec((tile_m, embed_dim), lambda i: (i, 0)),
        compiler_params=pltpu.CompilerParams(
            dimension_semantics=("parallel",),
        ),
    )(x2d, weight, b2d)

    if m_pad != m:
        out = out[:m]
    return out.reshape(*lead, embed_dim)


if __name__ == "__main__":
    # Module config: Time2VecPlaceholder(input_dim=16, embed_dim=32)
    input_dim = 16
    embed_dim = 32
    batch, seq = 2, 8

    key = jax.random.PRNGKey(0)
    kx, kw, kb = jax.random.split(key, 3)

    x = jax.random.normal(kx, (batch, seq, input_dim), dtype=jnp.float32)

    # Deterministic synthetic parameters (nn.Linear shapes: weight [out, in], bias [out]).
    bound = 1.0 / (input_dim ** 0.5)
    weight = jax.random.uniform(
        kw, (embed_dim, input_dim), minval=-bound, maxval=bound, dtype=jnp.float32
    )
    bias = jax.random.uniform(
        kb, (embed_dim,), minval=-bound, maxval=bound, dtype=jnp.float32
    )

    y = time2vec_placeholder_forward(x, weight, bias)
    y = jax.block_until_ready(y)

    # Cross-check against plain JAX reference (nn.Linear semantics).
    y_ref = x @ weight.T + bias
    assert y.shape == (batch, seq, embed_dim)
    assert jnp.allclose(y, y_ref, atol=1e-5, rtol=1e-5)

    print("KERNEL_OK")
</pallas_src>

<mosaic_0001>
module attributes {stable_mosaic.version = 11 : i64} {
  func.func @_linear_kernel(%arg0: i32, %arg1: memref<16x16xf32, #tpu.memory_space<vmem>>, %arg2: memref<32x16xf32, #tpu.memory_space<vmem>>, %arg3: memref<1x32xf32, #tpu.memory_space<vmem>>, %arg4: memref<16x32xf32, #tpu.memory_space<vmem>>) attributes {dimension_semantics = [#tpu.dimension_semantics<parallel>], iteration_bounds = array<i64: 1>, scalar_prefetch = 0 : i64, scratch_operands = 0 : i64, tpu.core_type = #tpu.core_type<tc>, window_params = [{transform_indices = @transform_0, window_bounds = array<i64: 16, 16>}, {pipeline_mode = #tpu.pipeline_mode<synchronous>, transform_indices = @transform_1, window_bounds = array<i64: 32, 16>}, {pipeline_mode = #tpu.pipeline_mode<synchronous>, transform_indices = @transform_2, window_bounds = array<i64: 1, 32>}, {transform_indices = @transform_3, window_bounds = array<i64: 16, 32>}]} {
    %c0 = arith.constant 0 : index
    %c0_0 = arith.constant 0 : index
    %0 = vector.load %arg1[%c0, %c0_0] : memref<16x16xf32, #tpu.memory_space<vmem>>, vector<16x16xf32>
    %c0_1 = arith.constant 0 : index
    %c0_2 = arith.constant 0 : index
    %1 = vector.load %arg2[%c0_1, %c0_2] : memref<32x16xf32, #tpu.memory_space<vmem>>, vector<32x16xf32>
    %cst = arith.constant dense<0.000000e+00> : vector<16x32xf32>
    %2 = tpu.matmul %0, %1, %cst {dimension_numbers = #tpu.dot_dimension_numbers<[1], [1], [0], [0], [0, 0, 1, 0], [], []>} : vector<16x16xf32>, vector<32x16xf32>, vector<16x32xf32> -> vector<16x32xf32>
    %c0_3 = arith.constant 0 : index
    %c0_4 = arith.constant 0 : index
    %3 = vector.load %arg3[%c0_3, %c0_4] : memref<1x32xf32, #tpu.memory_space<vmem>>, vector<1x32xf32>
    %4 = vector.broadcast %3 : vector<1x32xf32> to vector<16x32xf32>
    %5 = arith.addf %2, %4 : vector<16x32xf32>
    %c0_5 = arith.constant 0 : index
    %c0_6 = arith.constant 0 : index
    %6 = vector.load %arg4[%c0_5, %c0_6] : memref<16x32xf32, #tpu.memory_space<vmem>>, vector<16x32xf32>
    tpu.vector_store %arg4[%c0_5, %c0_6], %5 {strides = array<i32>} : memref<16x32xf32, #tpu.memory_space<vmem>>, vector<16x32xf32>,
    return
  }
  func.func @transform_0(%arg0: i32) -> (i32, i32) {
    %c0_i32 = arith.constant 0 : i32
    %c0_i32_0 = arith.constant 0 : i32
    return %arg0, %c0_i32 : i32, i32
  }
  func.func @transform_1(%arg0: i32) -> (i32, i32) {
    %c0_i32 = arith.constant 0 : i32
    %c0_i32_0 = arith.constant 0 : i32
    %c0_i32_1 = arith.constant 0 : i32
    return %c0_i32, %c0_i32_0 : i32, i32
  }
  func.func @transform_2(%arg0: i32) -> (i32, i32) {
    %c0_i32 = arith.constant 0 : i32
    %c0_i32_0 = arith.constant 0 : i32
    %c0_i32_1 = arith.constant 0 : i32
    return %c0_i32, %c0_i32_0 : i32, i32
  }
  func.func @transform_3(%arg0: i32) -> (i32, i32) {
    %c0_i32 = arith.constant 0 : i32
    %c0_i32_0 = arith.constant 0 : i32
    return %arg0, %c0_i32 : i32, i32
  }
}

</mosaic_0001>

<llo_original>
// kernel: tpu_custom_call.1
$region0: #{tpu_custom_call.1}
  #allocation0 [shape = 'u32[]', space=smem, size = 0x4, offset = 0x4, fixed_abs, tag = 'smem constant byte address 0x4 - core index']
  #allocation1 [shape = 'u32[144,128]{1,0:T(1,128)}', space=vmem, size = 0x12000, scoped, tag = 'internal scratch']
  %s0 = inlined_call_operand.vmem [shape: f32[16,16], index: 0, kind: input, shape index: {}]
  %s1 = inlined_call_operand.vmem [shape: f32[32,16], index: 1, kind: input, shape index: {}]
  %s2 = inlined_call_operand.vmem [shape: f32[1,32], index: 2, kind: input, shape index: {}]
  %s3 = inlined_call_operand.hbm [shape: f32[16,32], index: 3, kind: output, shape index: {}]
  %s4 = sld [smem:[#allocation0]]
  $region22: #{tpu_custom_call.1} parent=0
    _
  %s6 = ssub.s32 1, %s4
  %s7 = scalar_select 0, %s6, %s4
  $region1: #{tpu_custom_call.1} parent=0
    #allocation2 [shape = 'u8[8192]{0}', space=vmem, size = 0x2000, scoped, tag = 'output window, operand 0, single buffered']
    #allocation3 [shape = 's32[1]{0}', space=sflag, size = 0x4, scoped, tag = 'scoped memory for tpu_custom_call.1']
    %8 = vsyncpa [#allocation3], 0
    // Predicated region
    $region2: #{tpu_custom_call.1} parent=1 // pred_check
      _
    $region3: #{tpu_custom_call.1} parent=1 // pred_check_branch
      %10 = sbr.rel (0) target = $region5
    $region4: #{tpu_custom_call.1} parent=1 // pred_region
      _
    $region5: #{tpu_custom_call.1} parent=1 // pred_fallthru
      _
    // Predicated region
    $region6: #{tpu_custom_call.1} parent=1 // pred_check
      _
    $region7: #{tpu_custom_call.1} parent=1 // pred_check_branch
      %12 = sbr.rel (0) target = $region9
    $region8: #{tpu_custom_call.1} parent=1 // pred_region
      _
    $region9: #{tpu_custom_call.1} parent=1 // pred_fallthru
      _
    // Predicated region
    $region10: #{tpu_custom_call.1} parent=1 // pred_check
      _
    $region11: #{tpu_custom_call.1} parent=1 // pred_check_branch
      %14 = sbr.rel (0) target = $region13
    $region12: #{tpu_custom_call.1} parent=1 // pred_region
      _
    $region13: #{tpu_custom_call.1} parent=1 // pred_fallthru
      _
    %v15 = vld [vmem:[%s0] sm:$0xff]
    %v16 = vld [vmem:[%s0 + $0x8] sm:$0xff]
    %v17 = vld [vmem:[%s1] sm:$0xff]
    %v18 = vld [vmem:[%s1 + $0x8] sm:$0xff]
    %v19 = vld [vmem:[%s1 + $0x10] sm:$0xff]
    %v20 = vld [vmem:[%s1 + $0x18] sm:$0xff]
    %v21 = vld [vmem:[%s2] sm:$0x1]
    %v23 = vlaneseq
    %v24 = vshrl.u32 %v23, 7
    %v25 = vsub.s32 0, %v24
    %v26 = vrot.slane %v21, %v25
    %vm28 = vcmask 130048
    %v30 = vsel %vm28, %v15, 0
    %v33 = vsel %vm28, %v16, 0
    %v36 = vsel %vm28, %v17, 0
    %v39 = vsel %vm28, %v18, 0
    %v42 = vsel %vm28, %v19, 0
    %v45 = vsel %vm28, %v20, 0
    %47 = vmatprep.subr.mxu0 0.0
    %48 = vmatpush1.xpose.msra.mxu0 %v36
    %49 = vmatprep.subr.mxu0 0.0
    %50 = vmatpush1.xpose.msra.mxu0 %v39
    %51 = vmatprep.subr.mxu0 0.0
    %52 = vmatpush1.xpose.msra.mxu0 %v42
    %53 = vmatprep.subr.mxu0 0.0
    %54 = vmatpush1.xpose.msra.mxu0 %v45
    %55 = vmatprep.subr.mxu0 0.0
    %56 = vmatpush1.xpose.msra.mxu0 0.0
    %57 = vmatprep.subr.mxu0 0.0
    %58 = vmatpush1.xpose.msra.mxu0 0.0
    %59 = vmatprep.subr.mxu0 0.0
    %60 = vmatpush1.xpose.msra.mxu0 0.0
    %61 = vmatprep.subr.mxu0 0.0
    %62 = vmatpush1.xpose.msra.mxu0 0.0
    %63 = vmatprep.subr.mxu0 0.0
    %64 = vmatpush1.xpose.msra.mxu0 0.0
    %65 = vmatprep.subr.mxu0 0.0
    %66 = vmatpush1.xpose.msra.mxu0 0.0
    %67 = vmatprep.subr.mxu0 0.0
    %68 = vmatpush1.xpose.msra.mxu0 0.0
    %69 = vmatprep.subr.mxu0 0.0
    %70 = vmatpush1.xpose.msra.mxu0 0.0
    %71 = vmatprep.subr.mxu0 0.0
    %72 = vmatpush1.xpose.msra.mxu0 0.0
    %73 = vmatprep.subr.mxu0 0.0
    %74 = vmatpush1.xpose.msra.mxu0 0.0
    %75 = vmatprep.subr.mxu0 0.0
    %76 = vmatpush1.xpose.msra.mxu0 0.0
    %77 = vmatprep.subr.mxu0 0.0
    %78 = vmatpush1.xpose.msra.mxu0 0.0
    %79 = vmatprep.subr.mxu0 0.0
    %80 = vmatpush1.xpose.msra.mxu0 0.0
    %81 = vmatprep.subr.mxu0 0.0
    %82 = vmatpush1.xpose.msra.mxu0 0.0
    %83 = vmatprep.subr.mxu0 0.0
    %84 = vmatpush1.xpose.msra.mxu0 0.0
    %85 = vmatprep.subr.mxu0 0.0
    %86 = vmatpush1.xpose.msra.mxu0 0.0
    %87 = vmatprep.subr.mxu0 0.0
    %88 = vmatpush1.xpose.msra.mxu0 0.0
    %89 = vmatprep.subr.mxu0 0.0
    %90 = vmatpush1.xpose.msra.mxu0 0.0
    %91 = vmatprep.subr.mxu0 0.0
    %92 = vmatpush1.xpose.msra.mxu0 0.0
    %93 = vmatprep.subr.mxu0 0.0
    %94 = vmatpush1.xpose.msra.mxu0 0.0
    %95 = vmatprep.subr.mxu0 0.0
    %96 = vmatpush1.xpose.msra.mxu0 0.0
    %97 = vmatprep.subr.mxu0 0.0
    %98 = vmatpush1.xpose.msra.mxu0 0.0
    %99 = vmatprep.subr.mxu0 0.0
    %100 = vmatpush1.xpose.msra.mxu0 0.0
    %101 = vmatprep.subr.mxu0 0.0
    %102 = vmatpush1.xpose.msra.mxu0 0.0
    %103 = vmatprep.subr.mxu0 0.0
    %104 = vmatpush1.xpose.msra.mxu0 0.0
    %105 = vmatprep.subr.mxu0 0.0
    %106 = vmatpush1.xpose.msra.mxu0 0.0
    %107 = vmatprep.subr.mxu0 0.0
    %108 = vmatpush1.xpose.msra.mxu0 0.0
    %109 = vmatprep.subr.mxu0 0.0
    %110 = vmatpush1.xpose.msra.mxu0 0.0
    %111 = vmatprep.mubr.f32.mxu0 0.0
    %112 = vmatmul.mubr.f32.gmra.mrb[0].mxu0 %v30
    %v113 = vpop.f32.mrb[0].mxu0
    %v114 = vadd.f32 %v26, %v113
    %v115 = vpop.f32.mrb[0].mxu0
    %116 = vmatprep.mubr.f32.mxu0 0.0
    %117 = vmatmul.mubr.f32.gmra.mrb[0].mxu0 %v33
    %v118 = vpop.f32.mrb[0].mxu0
    %v119 = vadd.f32 %v26, %v118
    %v120 = vpop.f32.mrb[0].mxu0
    %121 = vdwg.mxu0
    %vm122 = vcmask 261120
    %123 = vst.msk [vmem:[#allocation2] sm:$0xff] %vm122, %v114
    %124 = vst.msk [vmem:[#allocation2 + $0x8] sm:$0xff] %vm122, %v119
    // Predicated region
    $region14: #{tpu_custom_call.1} parent=1 // pred_check
      _
    $region15: #{tpu_custom_call.1} parent=1 // pred_check_branch
      %126 = sbr.rel (0) target = $region17
    $region16: #{tpu_custom_call.1} parent=1 // pred_region
      %s128 = ssub.s32 256, 256
      %129 = vsyncadd [#allocation3], %s128
      %s130 = sshll.u32 [#allocation2], 4
      %s131 = int_to_ptr.vmem [resolvable:$true] %s130
      %136 = dma.vmem_to_hbm [thread:$0]  %s131, 256, %s3, [#allocation3], 128, 128, 8
    $region17: #{tpu_custom_call.1} parent=1 // pred_fallthru
      _
    // Predicated region
    $region18: #{tpu_custom_call.1} parent=1 // pred_check
      _
    $region19: #{tpu_custom_call.1} parent=1 // pred_check_branch
      %138 = sbr.rel (0) target = $region21
    $region20: #{tpu_custom_call.1} parent=1 // pred_region
      %139 = dma.done [#allocation3], 256
    $region21: #{tpu_custom_call.1} parent=1 // pred_fallthru
      _
    %140 = vsyncpa [#allocation3], 1

</llo_original>
